<compile_context>
chip_gen: v5e
topology: v5e:2x2
jax: 0.10.0
libtpu: 0.0.40
codegen_flags: <defaults>
</compile_context>

<pallas_src>
import functools

import jax
import jax.numpy as jnp
from jax.experimental import pallas as pl
from jax.experimental.pallas import tpu as pltpu

HIDDEN = 10
LANES = 128
SUBLANES = 8
ALIGN = SUBLANES * LANES  # 1024 samples = one (8, 128) f32 slab


def _mlp_kernel(params_ref, x_ref, o_ref, *, compute_dtype):
    # params_ref: SMEM (32,) f32 = [w1(10) | b1(10) | w2(10) | b2 | pad]
    # x_ref / o_ref: VMEM (block_rows, 128) f32; every element is an independent sample.
    x = x_ref[...].astype(compute_dtype)

    def p(i):
        return params_ref[i].astype(compute_dtype)

    # j = 0 term folded into the init together with b2 (no zeros fill, no final +b2).
    acc = (jnp.tanh(x * p(0) + p(HIDDEN)) * p(2 * HIDDEN)).astype(jnp.float32) \
        + params_ref[3 * HIDDEN]
    # Unrolled hidden units: VPU mul/add + one EUP tanh per unit, f32 accumulation.
    for j in range(1, HIDDEN):
        acc = acc + (jnp.tanh(x * p(j) + p(HIDDEN + j)) * p(2 * HIDDEN + j)).astype(jnp.float32)
    o_ref[...] = acc


def _choose_block_rows(rows, requested):
    """rows: slab height in sublane rows (multiple of 8).  Returns a block height
    <= requested such that grid >= 2 unless the input is genuinely tiny."""
    req = max(SUBLANES, (int(requested) // SUBLANES) * SUBLANES)
    if rows <= 8 * SUBLANES:  # <= 64 rows (8192 samples): single block is fine
        return rows
    # At least two grid steps: DMA/compute overlap + v7x dual-TC sharding.
    half_up = pl.cdiv(pl.cdiv(rows, 2), SUBLANES) * SUBLANES
    return min(req, half_up)


def _pallas_mlp(params, x2, block_rows, compute_dtype):
    rows = x2.shape[0]
    br = _choose_block_rows(rows, block_rows)
    grid = (pl.cdiv(rows, br),)  # boundary block may overhang; OOB writes are masked
    kernel = functools.partial(_mlp_kernel, compute_dtype=compute_dtype)
    return pl.pallas_call(
        kernel,
        out_shape=jax.ShapeDtypeStruct((rows, LANES), jnp.float32),
        grid=grid,
        in_specs=[
            pl.BlockSpec(memory_space=pltpu.MemorySpace.SMEM),  # packed params (32,)
            pl.BlockSpec((br, LANES), lambda i: (i, 0)),        # lane-dense x tile
        ],
        out_specs=pl.BlockSpec((br, LANES), lambda i: (i, 0)),
        compiler_params=pltpu.CompilerParams(
            dimension_semantics=("parallel",),
        ),
    )(params, x2)


def unlinear_regression_forward(x, w1, b1, w2, b2, *, block_rows=1024,
                                compute_dtype=jnp.float32):
    """x: (N, 1) f32.  w1:(1,10) b1:(1,10) w2:(10,1) b2:(1,1).  Returns (N, 1) f32."""
    n = x.shape[0]
    block_rows = max(256, int(block_rows))  # never ship tiny blocks (per-step overhead)

    # Pack the 31 parameters into one SMEM-resident vector (padded to 32).
    params = jnp.concatenate([
        w1.reshape(-1).astype(jnp.float32),
        b1.reshape(-1).astype(jnp.float32),
        w2.reshape(-1).astype(jnp.float32),
        b2.reshape(-1).astype(jnp.float32),
        jnp.zeros((1,), jnp.float32),
    ])

    x_flat = x.reshape(-1).astype(jnp.float32)

    if n < ALIGN:
        # Tiny input: pad to a single (8, 128) block; copy cost is negligible here.
        xp = jnp.pad(x_flat, (0, ALIGN - n))
        out = _pallas_mlp(params, xp.reshape(SUBLANES, LANES), block_rows, compute_dtype)
        return out.reshape(-1)[:n].reshape(n, 1)

    # 1024-aligned prefix through the kernel (pure reshape, zero extra HBM passes).
    n_main = (n // ALIGN) * ALIGN
    x_main = x_flat[:n_main].reshape(n_main // LANES, LANES)
    out_main = _pallas_mlp(params, x_main, block_rows, compute_dtype).reshape(-1)

    if n_main == n:
        return out_main.reshape(n, 1)

    # <= 1023-sample tail in plain JAX (elementwise f32, no MXU), then one concat.
    tail = x_flat[n_main:]
    h = jnp.tanh(tail[:, None] * w1.reshape(1, HIDDEN) + b1.reshape(1, HIDDEN))
    out_tail = jnp.sum(h * w2.reshape(1, HIDDEN), axis=1) + b2.reshape(())
    return jnp.concatenate([out_main, out_tail]).reshape(n, 1)


def init_params(key):
    """Deterministic init mimicking nn.Linear's uniform(-1/sqrt(fan_in), 1/sqrt(fan_in))."""
    k1, k2, k3, k4 = jax.random.split(key, 4)
    bound1 = 1.0  # 1/sqrt(1)
    w1 = jax.random.uniform(k1, (1, 10), jnp.float32, -bound1, bound1)
    b1 = jax.random.uniform(k2, (1, 10), jnp.float32, -bound1, bound1)
    bound2 = 1.0 / jnp.sqrt(10.0)
    w2 = jax.random.uniform(k3, (10, 1), jnp.float32, -bound2, bound2)
    b2 = jax.random.uniform(k4, (1, 1), jnp.float32, -bound2, bound2)
    return w1, b1, w2, b2


if __name__ == "__main__":
    key = jax.random.PRNGKey(0)
    kx, kp = jax.random.split(key)
    w1, b1, w2, b2 = init_params(kp)

    def ref_fn(xv):  # pure-f32 elementwise reference of tanh(x@W1+b1)@W2+b2
        h = jnp.tanh(xv * w1.reshape(1, HIDDEN) + b1.reshape(1, HIDDEN))
        return jnp.sum(h * w2.reshape(1, HIDDEN), axis=1, keepdims=True) + b2.reshape(1, 1)

    # 1) Tiny batch: single (8, 128) block path.
    x_small = jax.random.normal(kx, (8, 1), jnp.float32)
    out_small = jax.block_until_ready(unlinear_regression_forward(x_small, w1, b1, w2, b2))
    assert out_small.shape == (8, 1)
    assert jnp.allclose(out_small, ref_fn(x_small), atol=1e-5, rtol=1e-5)

    # 2) 1024-multiple batch: kernel-only, no tail, no pad/slice copies.
    x_al = jax.random.normal(jax.random.PRNGKey(1), (4096, 1), jnp.float32)
    out_al = jax.block_until_ready(unlinear_regression_forward(x_al, w1, b1, w2, b2))
    assert out_al.shape == (4096, 1)
    assert jnp.allclose(out_al, ref_fn(x_al), atol=1e-5, rtol=1e-5)

    # 3) Ragged batch: multi-block pipelined grid (grid >= 2, boundary block
    #    overhangs and its OOB writes are masked) plus the pure-JAX tail path.
    n3 = 67_000
    x_rg = jax.random.normal(jax.random.PRNGKey(2), (n3, 1), jnp.float32)
    out_rg = jax.block_until_ready(unlinear_regression_forward(x_rg, w1, b1, w2, b2))
    assert out_rg.shape == (n3, 1)
    assert jnp.allclose(out_rg, ref_fn(x_rg), atol=1e-5, rtol=1e-5)

    print("KERNEL_OK")
</pallas_src>

<mosaic_0001>
module attributes {stable_mosaic.version = 11 : i64} {
  func.func @_mlp_kernel(%arg0: i32, %arg1: memref<32xf32, #tpu.memory_space<smem>>, %arg2: memref<8x128xf32, #tpu.memory_space<vmem>>, %arg3: memref<8x128xf32, #tpu.memory_space<vmem>>) attributes {dimension_semantics = [#tpu.dimension_semantics<parallel>], iteration_bounds = array<i64: 1>, scalar_prefetch = 0 : i64, scratch_operands = 0 : i64, tpu.core_type = #tpu.core_type<tc>, window_params = [{transform_indices = @transform_0, window_bounds = array<i64: 32>}, {transform_indices = @transform_1, window_bounds = array<i64: 8, 128>}, {transform_indices = @transform_2, window_bounds = array<i64: 8, 128>}]} {
    %c0 = arith.constant 0 : index
    %c0_0 = arith.constant 0 : index
    %0 = vector.load %arg2[%c0, %c0_0] : memref<8x128xf32, #tpu.memory_space<vmem>>, vector<8x128xf32>
    %c0_1 = arith.constant 0 : index
    %1 = memref.load %arg1[%c0_1] : memref<32xf32, #tpu.memory_space<smem>>
    %2 = vector.broadcast %1 : f32 to vector<8x128xf32>
    %3 = arith.mulf %0, %2 : vector<8x128xf32>
    %c10 = arith.constant 10 : index
    %4 = memref.load %arg1[%c10] : memref<32xf32, #tpu.memory_space<smem>>
    %5 = vector.broadcast %4 : f32 to vector<8x128xf32>
    %6 = arith.addf %3, %5 : vector<8x128xf32>
    %7 = math.tanh %6 : vector<8x128xf32>
    %c20 = arith.constant 20 : index
    %8 = memref.load %arg1[%c20] : memref<32xf32, #tpu.memory_space<smem>>
    %9 = vector.broadcast %8 : f32 to vector<8x128xf32>
    %10 = arith.mulf %7, %9 : vector<8x128xf32>
    %c30 = arith.constant 30 : index
    %11 = memref.load %arg1[%c30] : memref<32xf32, #tpu.memory_space<smem>>
    %12 = vector.broadcast %11 : f32 to vector<8x128xf32>
    %13 = arith.addf %10, %12 : vector<8x128xf32>
    %c1 = arith.constant 1 : index
    %14 = memref.load %arg1[%c1] : memref<32xf32, #tpu.memory_space<smem>>
    %15 = vector.broadcast %14 : f32 to vector<8x128xf32>
    %16 = arith.mulf %0, %15 : vector<8x128xf32>
    %c11 = arith.constant 11 : index
    %17 = memref.load %arg1[%c11] : memref<32xf32, #tpu.memory_space<smem>>
    %18 = vector.broadcast %17 : f32 to vector<8x128xf32>
    %19 = arith.addf %16, %18 : vector<8x128xf32>
    %20 = math.tanh %19 : vector<8x128xf32>
    %c21 = arith.constant 21 : index
    %21 = memref.load %arg1[%c21] : memref<32xf32, #tpu.memory_space<smem>>
    %22 = vector.broadcast %21 : f32 to vector<8x128xf32>
    %23 = arith.mulf %20, %22 : vector<8x128xf32>
    %24 = arith.addf %13, %23 : vector<8x128xf32>
    %c2 = arith.constant 2 : index
    %25 = memref.load %arg1[%c2] : memref<32xf32, #tpu.memory_space<smem>>
    %26 = vector.broadcast %25 : f32 to vector<8x128xf32>
    %27 = arith.mulf %0, %26 : vector<8x128xf32>
    %c12 = arith.constant 12 : index
    %28 = memref.load %arg1[%c12] : memref<32xf32, #tpu.memory_space<smem>>
    %29 = vector.broadcast %28 : f32 to vector<8x128xf32>
    %30 = arith.addf %27, %29 : vector<8x128xf32>
    %31 = math.tanh %30 : vector<8x128xf32>
    %c22 = arith.constant 22 : index
    %32 = memref.load %arg1[%c22] : memref<32xf32, #tpu.memory_space<smem>>
    %33 = vector.broadcast %32 : f32 to vector<8x128xf32>
    %34 = arith.mulf %31, %33 : vector<8x128xf32>
    %35 = arith.addf %24, %34 : vector<8x128xf32>
    %c3 = arith.constant 3 : index
    %36 = memref.load %arg1[%c3] : memref<32xf32, #tpu.memory_space<smem>>
    %37 = vector.broadcast %36 : f32 to vector<8x128xf32>
    %38 = arith.mulf %0, %37 : vector<8x128xf32>
    %c13 = arith.constant 13 : index
    %39 = memref.load %arg1[%c13] : memref<32xf32, #tpu.memory_space<smem>>
    %40 = vector.broadcast %39 : f32 to vector<8x128xf32>
    %41 = arith.addf %38, %40 : vector<8x128xf32>
    %42 = math.tanh %41 : vector<8x128xf32>
    %c23 = arith.constant 23 : index
    %43 = memref.load %arg1[%c23] : memref<32xf32, #tpu.memory_space<smem>>
    %44 = vector.broadcast %43 : f32 to vector<8x128xf32>
    %45 = arith.mulf %42, %44 : vector<8x128xf32>
    %46 = arith.addf %35, %45 : vector<8x128xf32>
    %c4 = arith.constant 4 : index
    %47 = memref.load %arg1[%c4] : memref<32xf32, #tpu.memory_space<smem>>
    %48 = vector.broadcast %47 : f32 to vector<8x128xf32>
    %49 = arith.mulf %0, %48 : vector<8x128xf32>
    %c14 = arith.constant 14 : index
    %50 = memref.load %arg1[%c14] : memref<32xf32, #tpu.memory_space<smem>>
    %51 = vector.broadcast %50 : f32 to vector<8x128xf32>
    %52 = arith.addf %49, %51 : vector<8x128xf32>
    %53 = math.tanh %52 : vector<8x128xf32>
    %c24 = arith.constant 24 : index
    %54 = memref.load %arg1[%c24] : memref<32xf32, #tpu.memory_space<smem>>
    %55 = vector.broadcast %54 : f32 to vector<8x128xf32>
    %56 = arith.mulf %53, %55 : vector<8x128xf32>
    %57 = arith.addf %46, %56 : vector<8x128xf32>
    %c5 = arith.constant 5 : index
    %58 = memref.load %arg1[%c5] : memref<32xf32, #tpu.memory_space<smem>>
    %59 = vector.broadcast %58 : f32 to vector<8x128xf32>
    %60 = arith.mulf %0, %59 : vector<8x128xf32>
    %c15 = arith.constant 15 : index
    %61 = memref.load %arg1[%c15] : memref<32xf32, #tpu.memory_space<smem>>
    %62 = vector.broadcast %61 : f32 to vector<8x128xf32>
    %63 = arith.addf %60, %62 : vector<8x128xf32>
    %64 = math.tanh %63 : vector<8x128xf32>
    %c25 = arith.constant 25 : index
    %65 = memref.load %arg1[%c25] : memref<32xf32, #tpu.memory_space<smem>>
    %66 = vector.broadcast %65 : f32 to vector<8x128xf32>
    %67 = arith.mulf %64, %66 : vector<8x128xf32>
    %68 = arith.addf %57, %67 : vector<8x128xf32>
    %c6 = arith.constant 6 : index
    %69 = memref.load %arg1[%c6] : memref<32xf32, #tpu.memory_space<smem>>
    %70 = vector.broadcast %69 : f32 to vector<8x128xf32>
    %71 = arith.mulf %0, %70 : vector<8x128xf32>
    %c16 = arith.constant 16 : index
    %72 = memref.load %arg1[%c16] : memref<32xf32, #tpu.memory_space<smem>>
    %73 = vector.broadcast %72 : f32 to vector<8x128xf32>
    %74 = arith.addf %71, %73 : vector<8x128xf32>
    %75 = math.tanh %74 : vector<8x128xf32>
    %c26 = arith.constant 26 : index
    %76 = memref.load %arg1[%c26] : memref<32xf32, #tpu.memory_space<smem>>
    %77 = vector.broadcast %76 : f32 to vector<8x128xf32>
    %78 = arith.mulf %75, %77 : vector<8x128xf32>
    %79 = arith.addf %68, %78 : vector<8x128xf32>
    %c7 = arith.constant 7 : index
    %80 = memref.load %arg1[%c7] : memref<32xf32, #tpu.memory_space<smem>>
    %81 = vector.broadcast %80 : f32 to vector<8x128xf32>
    %82 = arith.mulf %0, %81 : vector<8x128xf32>
    %c17 = arith.constant 17 : index
    %83 = memref.load %arg1[%c17] : memref<32xf32, #tpu.memory_space<smem>>
    %84 = vector.broadcast %83 : f32 to vector<8x128xf32>
    %85 = arith.addf %82, %84 : vector<8x128xf32>
    %86 = math.tanh %85 : vector<8x128xf32>
    %c27 = arith.constant 27 : index
    %87 = memref.load %arg1[%c27] : memref<32xf32, #tpu.memory_space<smem>>
    %88 = vector.broadcast %87 : f32 to vector<8x128xf32>
    %89 = arith.mulf %86, %88 : vector<8x128xf32>
    %90 = arith.addf %79, %89 : vector<8x128xf32>
    %c8 = arith.constant 8 : index
    %91 = memref.load %arg1[%c8] : memref<32xf32, #tpu.memory_space<smem>>
    %92 = vector.broadcast %91 : f32 to vector<8x128xf32>
    %93 = arith.mulf %0, %92 : vector<8x128xf32>
    %c18 = arith.constant 18 : index
    %94 = memref.load %arg1[%c18] : memref<32xf32, #tpu.memory_space<smem>>
    %95 = vector.broadcast %94 : f32 to vector<8x128xf32>
    %96 = arith.addf %93, %95 : vector<8x128xf32>
    %97 = math.tanh %96 : vector<8x128xf32>
    %c28 = arith.constant 28 : index
    %98 = memref.load %arg1[%c28] : memref<32xf32, #tpu.memory_space<smem>>
    %99 = vector.broadcast %98 : f32 to vector<8x128xf32>
    %100 = arith.mulf %97, %99 : vector<8x128xf32>
    %101 = arith.addf %90, %100 : vector<8x128xf32>
    %c9 = arith.constant 9 : index
    %102 = memref.load %arg1[%c9] : memref<32xf32, #tpu.memory_space<smem>>
    %103 = vector.broadcast %102 : f32 to vector<8x128xf32>
    %104 = arith.mulf %0, %103 : vector<8x128xf32>
    %c19 = arith.constant 19 : index
    %105 = memref.load %arg1[%c19] : memref<32xf32, #tpu.memory_space<smem>>
    %106 = vector.broadcast %105 : f32 to vector<8x128xf32>
    %107 = arith.addf %104, %106 : vector<8x128xf32>
    %108 = math.tanh %107 : vector<8x128xf32>
    %c29 = arith.constant 29 : index
    %109 = memref.load %arg1[%c29] : memref<32xf32, #tpu.memory_space<smem>>
    %110 = vector.broadcast %109 : f32 to vector<8x128xf32>
    %111 = arith.mulf %108, %110 : vector<8x128xf32>
    %112 = arith.addf %101, %111 : vector<8x128xf32>
    %c0_2 = arith.constant 0 : index
    %c0_3 = arith.constant 0 : index
    %113 = vector.load %arg3[%c0_2, %c0_3] : memref<8x128xf32, #tpu.memory_space<vmem>>, vector<8x128xf32>
    tpu.vector_store %arg3[%c0_2, %c0_3], %112 {strides = array<i32>} : memref<8x128xf32, #tpu.memory_space<vmem>>, vector<8x128xf32>,
    return
  }
  func.func @transform_0(%arg0: i32) -> i32 {
    %c0_i32 = arith.constant 0 : i32
    %c0_i32_0 = arith.constant 0 : i32
    return %c0_i32 : i32
  }
  func.func @transform_1(%arg0: i32) -> (i32, i32) {
    %c0_i32 = arith.constant 0 : i32
    %c0_i32_0 = arith.constant 0 : i32
    return %arg0, %c0_i32 : i32, i32
  }
  func.func @transform_2(%arg0: i32) -> (i32, i32) {
    %c0_i32 = arith.constant 0 : i32
    %c0_i32_0 = arith.constant 0 : i32
    return %arg0, %c0_i32 : i32, i32
  }
}

</mosaic_0001>

<llo_original>
// kernel: tpu_custom_call.1
$region0: #{tpu_custom_call.1}
  #allocation0 [shape = 'u32[]', space=smem, size = 0x4, offset = 0x4, fixed_abs, tag = 'smem constant byte address 0x4 - core index']
  #allocation1 [shape = 'u32[72,128]{1,0:T(1,128)}', space=vmem, size = 0x9000, scoped, tag = 'internal scratch']
  %s0 = inlined_call_operand.hbm [shape: f32[32], index: 0, kind: input, shape index: {}]
  %s1 = inlined_call_operand.hbm [shape: f32[8,128], index: 1, kind: input, shape index: {}]
  %s2 = inlined_call_operand.hbm [shape: f32[8,128], index: 2, kind: output, shape index: {}]
  %s3 = sld [smem:[#allocation0]]
  $region26: #{tpu_custom_call.1} parent=0
    _
  %s5 = ssub.s32 1, %s3
  %s6 = scalar_select 0, %s5, %s3
  $region1: #{tpu_custom_call.1} parent=0
    #allocation2 [shape = 'u8[512]{0}', space=smem, size = 0x200, scoped, tag = 'input window, operand 0, single buffered']
    #allocation3 [shape = 's32[1]{0}', space=sflag, size = 0x4, scoped, tag = 'scoped memory for tpu_custom_call.1']
    #allocation4 [shape = 's32[1]{0}', space=sflag, size = 0x4, scoped, tag = 'scoped memory for tpu_custom_call.1']
    #allocation5 [shape = 's32[1]{0}', space=sflag, size = 0x4, scoped, tag = 'scoped memory for tpu_custom_call.1']
    #allocation6 [shape = 'u8[4096]{0}', space=vmem, size = 0x1000, scoped, tag = 'input window, operand 1, single buffered']
    #allocation7 [shape = 'u8[4096]{0}', space=vmem, size = 0x1000, scoped, tag = 'output window, operand 0, single buffered']
    %7 = vsyncpa [#allocation5], 0
    %8 = vsyncpa [#allocation3], 0
    %9 = vsyncpa [#allocation4], 0
    // Predicated region
    $region2: #{tpu_custom_call.1} parent=1 // pred_check
      _
    $region3: #{tpu_custom_call.1} parent=1 // pred_check_branch
      %11 = sbr.rel (0) target = $region5
    $region4: #{tpu_custom_call.1} parent=1 // pred_region
      %13 = vsyncadd [#allocation5], 0
      %s15 = sshll.u32 %s0, 4
      %s16 = int_to_ptr.hbm [resolvable:$true] %s15
      %18 = dma.hbm_to_smem %s16, 16, [#allocation2], [#allocation5]
    $region5: #{tpu_custom_call.1} parent=1 // pred_fallthru
      _
    // Predicated region
    $region6: #{tpu_custom_call.1} parent=1 // pred_check
      _
    $region7: #{tpu_custom_call.1} parent=1 // pred_check_branch
      %20 = sbr.rel (0) target = $region9
    $region8: #{tpu_custom_call.1} parent=1 // pred_region
      %22 = vsyncadd [#allocation3], 0
      %s24 = sshll.u32 %s1, 4
      %s25 = int_to_ptr.hbm [resolvable:$true] %s24
      %s26 = sshll.u32 [#allocation6], 4
      %s27 = int_to_ptr.vmem [resolvable:$true] %s26
      %29 = dma.hbm_to_vmem [thread:$0]  %s25, 128, %s27, [#allocation3]
    $region9: #{tpu_custom_call.1} parent=1 // pred_fallthru
      _
    // Predicated region
    $region10: #{tpu_custom_call.1} parent=1 // pred_check
      _
    $region11: #{tpu_custom_call.1} parent=1 // pred_check_branch
      %31 = sbr.rel (0) target = $region13
    $region12: #{tpu_custom_call.1} parent=1 // pred_region
      %33 = dma.done [#allocation5], 16
    $region13: #{tpu_custom_call.1} parent=1 // pred_fallthru
      _
    // Predicated region
    $region14: #{tpu_custom_call.1} parent=1 // pred_check
      _
    $region15: #{tpu_custom_call.1} parent=1 // pred_check_branch
      %35 = sbr.rel (0) target = $region17
    $region16: #{tpu_custom_call.1} parent=1 // pred_region
      %37 = dma.done [#allocation3], 128
    $region17: #{tpu_custom_call.1} parent=1 // pred_fallthru
      _
    %38 = sfence
    %v39 = vld [vmem:[#allocation6] sm:$0xff]
    %s40 = sld [smem:[#allocation2]]
    %v41 = vstv %s40
    %v42 = vmul.f32 %v39, %v41
    %s43 = sld [smem:[#allocation2 + $0xa]]
    %v44 = vstv %s43
    %v45 = vadd.f32 %v42, %v44
    %v46 = vtanh.pop %v45
    %s47 = sld [smem:[#allocation2 + $0x14]]
    %v48 = vstv %s47
    %v49 = vmul.f32 %v46, %v48
    %s50 = sld [smem:[#allocation2 + $0x1e]]
    %v51 = vstv %s50
    %v52 = vadd.f32 %v49, %v51
    %s53 = sld [smem:[#allocation2 + $0x1]]
    %v54 = vstv %s53
    %v55 = vmul.f32 %v39, %v54
    %s56 = sld [smem:[#allocation2 + $0xb]]
    %v57 = vstv %s56
    %v58 = vadd.f32 %v55, %v57
    %v59 = vtanh.pop %v58
    %s60 = sld [smem:[#allocation2 + $0x15]]
    %v61 = vstv %s60
    %v62 = vmul.f32 %v59, %v61
    %v63 = vadd.f32 %v52, %v62
    %s64 = sld [smem:[#allocation2 + $0x2]]
    %v65 = vstv %s64
    %v66 = vmul.f32 %v39, %v65
    %s67 = sld [smem:[#allocation2 + $0xc]]
    %v68 = vstv %s67
    %v69 = vadd.f32 %v66, %v68
    %v70 = vtanh.pop %v69
    %s71 = sld [smem:[#allocation2 + $0x16]]
    %v72 = vstv %s71
    %v73 = vmul.f32 %v70, %v72
    %v74 = vadd.f32 %v63, %v73
    %s75 = sld [smem:[#allocation2 + $0x3]]
    %v76 = vstv %s75
    %v77 = vmul.f32 %v39, %v76
    %s78 = sld [smem:[#allocation2 + $0xd]]
    %v79 = vstv %s78
    %v80 = vadd.f32 %v77, %v79
    %v81 = vtanh.pop %v80
    %s82 = sld [smem:[#allocation2 + $0x17]]
    %v83 = vstv %s82
    %v84 = vmul.f32 %v81, %v83
    %v85 = vadd.f32 %v74, %v84
    %s86 = sld [smem:[#allocation2 + $0x4]]
    %v87 = vstv %s86
    %v88 = vmul.f32 %v39, %v87
    %s89 = sld [smem:[#allocation2 + $0xe]]
    %v90 = vstv %s89
    %v91 = vadd.f32 %v88, %v90
    %v92 = vtanh.pop %v91
    %s93 = sld [smem:[#allocation2 + $0x18]]
    %v94 = vstv %s93
    %v95 = vmul.f32 %v92, %v94
    %v96 = vadd.f32 %v85, %v95
    %s97 = sld [smem:[#allocation2 + $0x5]]
    %v98 = vstv %s97
    %v99 = vmul.f32 %v39, %v98
    %s100 = sld [smem:[#allocation2 + $0xf]]
    %v101 = vstv %s100
    %v102 = vadd.f32 %v99, %v101
    %v103 = vtanh.pop %v102
    %s104 = sld [smem:[#allocation2 + $0x19]]
    %v105 = vstv %s104
    %v106 = vmul.f32 %v103, %v105
    %v107 = vadd.f32 %v96, %v106
    %s108 = sld [smem:[#allocation2 + $0x6]]
    %v109 = vstv %s108
    %v110 = vmul.f32 %v39, %v109
    %s111 = sld [smem:[#allocation2 + $0x10]]
    %v112 = vstv %s111
    %v113 = vadd.f32 %v110, %v112
    %v114 = vtanh.pop %v113
    %s115 = sld [smem:[#allocation2 + $0x1a]]
    %v116 = vstv %s115
    %v117 = vmul.f32 %v114, %v116
    %v118 = vadd.f32 %v107, %v117
    %s119 = sld [smem:[#allocation2 + $0x7]]
    %v120 = vstv %s119
    %v121 = vmul.f32 %v39, %v120
    %s122 = sld [smem:[#allocation2 + $0x11]]
    %v123 = vstv %s122
    %v124 = vadd.f32 %v121, %v123
    %v125 = vtanh.pop %v124
    %s126 = sld [smem:[#allocation2 + $0x1b]]
    %v127 = vstv %s126
    %v128 = vmul.f32 %v125, %v127
    %v129 = vadd.f32 %v118, %v128
    %s130 = sld [smem:[#allocation2 + $0x8]]
    %v131 = vstv %s130
    %v132 = vmul.f32 %v39, %v131
    %s133 = sld [smem:[#allocation2 + $0x12]]
    %v134 = vstv %s133
    %v135 = vadd.f32 %v132, %v134
    %v136 = vtanh.pop %v135
    %s137 = sld [smem:[#allocation2 + $0x1c]]
    %v138 = vstv %s137
    %v139 = vmul.f32 %v136, %v138
    %v140 = vadd.f32 %v129, %v139
    %s141 = sld [smem:[#allocation2 + $0x9]]
    %v142 = vstv %s141
    %v143 = vmul.f32 %v39, %v142
    %s144 = sld [smem:[#allocation2 + $0x13]]
    %v145 = vstv %s144
    %v146 = vadd.f32 %v143, %v145
    %v147 = vtanh.pop %v146
    %s148 = sld [smem:[#allocation2 + $0x1d]]
    %v149 = vstv %s148
    %v150 = vmul.f32 %v147, %v149
    %v151 = vadd.f32 %v140, %v150
    %152 = vst [vmem:[#allocation7] sm:$0xff] %v151
    // Predicated region
    $region18: #{tpu_custom_call.1} parent=1 // pred_check
      _
    $region19: #{tpu_custom_call.1} parent=1 // pred_check_branch
      %154 = sbr.rel (0) target = $region21
    $region20: #{tpu_custom_call.1} parent=1 // pred_region
      %156 = vsyncadd [#allocation4], 0
      %s158 = sshll.u32 [#allocation7], 4
      %s159 = int_to_ptr.vmem [resolvable:$true] %s158
      %s160 = sshll.u32 %s2, 4
      %s161 = int_to_ptr.hbm [resolvable:$true] %s160
      %163 = dma.vmem_to_hbm [thread:$0]  %s159, 128, %s161, [#allocation4]
    $region21: #{tpu_custom_call.1} parent=1 // pred_fallthru
      _
    // Predicated region
    $region22: #{tpu_custom_call.1} parent=1 // pred_check
      _
    $region23: #{tpu_custom_call.1} parent=1 // pred_check_branch
      %165 = sbr.rel (0) target = $region25
    $region24: #{tpu_custom_call.1} parent=1 // pred_region
      %167 = dma.done [#allocation4], 128
    $region25: #{tpu_custom_call.1} parent=1 // pred_fallthru
      _
    %168 = vsyncpa [#allocation3], 1
    %169 = vsyncpa [#allocation4], 1
    %170 = vsyncpa [#allocation5], 1

</llo_original>
